<compile_context>
chip_gen: v6e
topology: v6e:2x2x1
jax: 0.10.0
libtpu: 0.0.40
codegen_flags: <defaults>
</compile_context>

<pallas_src>
import jax
import jax.numpy as jnp
from jax.experimental import pallas as pl
from jax.experimental.pallas import tpu as pltpu


def _fixed_power_law1_kernel(d_ref, o_ref):
    x = d_ref[...]                       # (tr, lane) tile in VMEM
    big = jnp.finfo(x.dtype).max         # torch.finfo(dtype).max
    y = jnp.log(x)                       # EUP; selects below ride free VPU slots
    # torch.nan_to_num defaults: NaN -> max, +inf -> max, -inf -> min (= -max).
    y = jnp.where(jnp.isnan(y) | (y == jnp.inf), big, y)
    y = jnp.where(y == -jnp.inf, -big, y)
    o_ref[...] = -y


def _choose_lane(n, max_lane=4096):
    """Largest multiple of 128 (<= max_lane) that divides n; 0 if none exists."""
    lane = (min(max_lane, n) // 128) * 128
    while lane >= 128:
        if n % lane == 0:
            return lane
        lane -= 128
    return 0


def fixed_power_law1(d, *, max_lane=4096, tile_bytes=4 << 20):
    """d: float array (B, ...) -> (B, 1, ...) with y = -nan_to_num(log(d))."""
    orig_shape = d.shape
    dtype = d.dtype
    n = int(d.size)
    itemsize = jnp.dtype(dtype).itemsize

    # ---- layout: flatten to a lane-dense 2D slab with no copies if possible --
    flat = d.reshape(-1)
    lane = _choose_lane(n, max_lane)
    padded = False
    if lane == 0:
        # n has no multiple-of-128 factor (rare, tiny-or-odd sizes): pad with
        # 1.0 (log(1)=0) to the next multiple of 128 and slice it off after.
        # This is the only path that pays extra HBM passes.
        lane = 128
        n_pad = pl.cdiv(n, lane) * lane
        flat = jnp.pad(flat, (0, n_pad - n), constant_values=1.0)
        padded = True
    else:
        n_pad = n
    n_rows = n_pad // lane
    x2 = flat.reshape(n_rows, lane)

    # ---- tile sizing: ~tile_bytes per tile (dtype-aware), 8-row aligned ------
    rows_target = max(8, (tile_bytes // (lane * itemsize)) // 8 * 8)
    tr = min(rows_target, n_rows)
    # Give the megacore split (v7x, 2 TCs) at least two grid steps when there
    # is enough data to split.
    if n_rows >= 16 and pl.cdiv(n_rows, tr) < 2:
        tr = ((n_rows + 1) // 2 + 7) // 8 * 8
    grid = (pl.cdiv(n_rows, tr),)   # partial last block handled by store masking

    out2 = pl.pallas_call(
        _fixed_power_law1_kernel,
        out_shape=jax.ShapeDtypeStruct((n_rows, lane), dtype),
        grid=grid,
        in_specs=[pl.BlockSpec((tr, lane), lambda i: (i, 0))],
        out_specs=pl.BlockSpec((tr, lane), lambda i: (i, 0)),
        compiler_params=pltpu.CompilerParams(
            dimension_semantics=("parallel",),      # megacore sharding on v7x
            vmem_limit_bytes=32 * 1024 * 1024,      # 4 MiB tiles x 2-deep x in/out
        ),
    )(x2)

    # ---- restore shape (no extra pass unless the pad fallback triggered) -----
    if padded:
        out = out2.reshape(-1)[:n].reshape(orig_shape)
    else:
        out = out2.reshape(orig_shape)
    return jnp.expand_dims(out, 1)   # torch .unsqueeze(1)


def _reference(d):
    big = jnp.finfo(d.dtype).max
    y = jnp.log(d)
    y = jnp.where(jnp.isnan(y), big, y)
    y = jnp.where(y == jnp.inf, big, y)
    y = jnp.where(y == -jnp.inf, -big, y)
    return jnp.expand_dims(-y, 1)


if __name__ == "__main__":
    key = jax.random.PRNGKey(0)

    # --- primary test: module-sized input (B, H, W) with 0 / negative entries
    B, H, W = 2, 16, 16
    k0, k1, k2 = jax.random.split(key, 3)
    d = jax.random.uniform(k0, (B, H, W), dtype=jnp.float32, minval=0.0, maxval=4.0)
    d = d.at[0, 0, 0].set(0.0)     # log -> -inf -> out = +finfo.max
    d = d.at[1, 3, 5].set(-1.0)    # log -> NaN  -> out = -finfo.max
    out = fixed_power_law1(d)
    jax.block_until_ready(out)
    ref = _reference(d)
    assert out.shape == (B, 1, H, W), out.shape
    assert jnp.allclose(out, ref, rtol=1e-6, atol=1e-6), "mismatch (primary)"

    # --- secondary test: exercises the multi-step grid + masked partial block
    d2 = jax.random.uniform(k1, (8, 272, 128), dtype=jnp.float32, minval=0.0, maxval=4.0)
    out2 = fixed_power_law1(d2)
    jax.block_until_ready(out2)
    assert out2.shape == (8, 1, 272, 128), out2.shape
    assert jnp.allclose(out2, _reference(d2), rtol=1e-6, atol=1e-6), "mismatch (tiled)"

    # --- tertiary test: odd size, exercises the pad fallback path
    d3 = jax.random.uniform(k2, (3, 7, 5), dtype=jnp.float32, minval=0.1, maxval=4.0)
    out3 = fixed_power_law1(d3)
    jax.block_until_ready(out3)
    assert out3.shape == (3, 1, 7, 5), out3.shape
    assert jnp.allclose(out3, _reference(d3), rtol=1e-6, atol=1e-6), "mismatch (pad path)"

    print("KERNEL_OK")
</pallas_src>

<mosaic_0001>
module attributes {stable_mosaic.version = 11 : i64} {
  func.func @_fixed_power_law1_kernel(%arg0: i32, %arg1: memref<1x512xf32, #tpu.memory_space<vmem>>, %arg2: memref<1x512xf32, #tpu.memory_space<vmem>>) attributes {dimension_semantics = [#tpu.dimension_semantics<parallel>], iteration_bounds = array<i64: 1>, scalar_prefetch = 0 : i64, scratch_operands = 0 : i64, tpu.core_type = #tpu.core_type<tc>, window_params = [{transform_indices = @transform_0, window_bounds = array<i64: 1, 512>}, {transform_indices = @transform_1, window_bounds = array<i64: 1, 512>}]} {
    %c0 = arith.constant 0 : index
    %c0_0 = arith.constant 0 : index
    %0 = vector.load %arg1[%c0, %c0_0] : memref<1x512xf32, #tpu.memory_space<vmem>>, vector<1x512xf32>
    %1 = math.log %0 : vector<1x512xf32>
    %2 = arith.cmpf one, %1, %1 : vector<1x512xf32>
    %cst = arith.constant 0x7F800000 : f32
    %3 = vector.broadcast %cst : f32 to vector<1x512xf32>
    %4 = arith.cmpf oeq, %1, %3 : vector<1x512xf32>
    %5 = arith.ori %2, %4 : vector<1x512xi1>
    %cst_1 = arith.constant 3.40282347E+38 : f32
    %6 = vector.broadcast %cst_1 : f32 to vector<1x512xf32>
    %7 = arith.select %5, %6, %1 : vector<1x512xi1>, vector<1x512xf32>
    %cst_2 = arith.constant 0xFF800000 : f32
    %8 = vector.broadcast %cst_2 : f32 to vector<1x512xf32>
    %9 = arith.cmpf oeq, %7, %8 : vector<1x512xf32>
    %cst_3 = arith.constant -3.40282347E+38 : f32
    %10 = vector.broadcast %cst_3 : f32 to vector<1x512xf32>
    %11 = arith.select %9, %10, %7 : vector<1x512xi1>, vector<1x512xf32>
    %cst_4 = arith.constant 0.000000e+00 : f32
    %12 = vector.broadcast %cst_4 : f32 to vector<1x512xf32>
    %13 = arith.subf %12, %11 : vector<1x512xf32>
    %c0_5 = arith.constant 0 : index
    %c0_6 = arith.constant 0 : index
    %14 = vector.load %arg2[%c0_5, %c0_6] : memref<1x512xf32, #tpu.memory_space<vmem>>, vector<1x512xf32>
    tpu.vector_store %arg2[%c0_5, %c0_6], %13 {strides = array<i32>} : memref<1x512xf32, #tpu.memory_space<vmem>>, vector<1x512xf32>,
    return
  }
  func.func @transform_0(%arg0: i32) -> (i32, i32) {
    %c0_i32 = arith.constant 0 : i32
    %c0_i32_0 = arith.constant 0 : i32
    return %arg0, %c0_i32 : i32, i32
  }
  func.func @transform_1(%arg0: i32) -> (i32, i32) {
    %c0_i32 = arith.constant 0 : i32
    %c0_i32_0 = arith.constant 0 : i32
    return %arg0, %c0_i32 : i32, i32
  }
}

</mosaic_0001>

<llo_original>
// kernel: tpu_custom_call.1
$region0: #{tpu_custom_call.1}
  #allocation0 [shape = 'u32[]', space=smem, size = 0x4, offset = 0x4, fixed_abs, tag = 'smem constant byte address 0x4 - core index']
  #allocation1 [shape = 'u32[144,128]{1,0:T(1,128)}', space=vmem, size = 0x12000, scoped, tag = 'internal scratch']
  %s0 = inlined_call_operand.hbm [shape: f32[1,512], index: 0, kind: input, shape index: {}]
  %s1 = inlined_call_operand.hbm [shape: f32[1,512], index: 1, kind: output, shape index: {}]
  %s2 = sld [smem:[#allocation0]]
  $region18: #{tpu_custom_call.1} parent=0
    _
  %s4 = ssub.s32 1, %s2
  %s5 = scalar_select 0, %s4, %s2
  $region1: #{tpu_custom_call.1} parent=0
    #allocation2 [shape = 'u8[2048]{0}', space=vmem, size = 0x800, scoped, tag = 'input window, operand 0, single buffered']
    #allocation3 [shape = 's32[1]{0}', space=sflag, size = 0x4, scoped, tag = 'scoped memory for tpu_custom_call.1']
    #allocation4 [shape = 's32[1]{0}', space=sflag, size = 0x4, scoped, tag = 'scoped memory for tpu_custom_call.1']
    #allocation5 [shape = 'u8[2048]{0}', space=vmem, size = 0x800, scoped, tag = 'output window, operand 0, single buffered']
    %6 = vsyncpa [#allocation3], 0
    %7 = vsyncpa [#allocation4], 0
    // Predicated region
    $region2: #{tpu_custom_call.1} parent=1 // pred_check
      _
    $region3: #{tpu_custom_call.1} parent=1 // pred_check_branch
      %9 = sbr.rel (0) target = $region5
    $region4: #{tpu_custom_call.1} parent=1 // pred_region
      %s11 = ssub.s32 64, 64
      %12 = vsyncadd [#allocation3], %s11
      %s14 = sshll.u32 [#allocation2], 4
      %s15 = int_to_ptr.vmem [resolvable:$true] %s14
      %17 = dma.hbm_to_vmem [thread:$0]  %s0, 64, %s15, [#allocation3]
    $region5: #{tpu_custom_call.1} parent=1 // pred_fallthru
      _
    // Predicated region
    $region6: #{tpu_custom_call.1} parent=1 // pred_check
      _
    $region7: #{tpu_custom_call.1} parent=1 // pred_check_branch
      %19 = sbr.rel (0) target = $region9
    $region8: #{tpu_custom_call.1} parent=1 // pred_region
      %20 = dma.done [#allocation3], 64
    $region9: #{tpu_custom_call.1} parent=1 // pred_fallthru
      _
    %v21 = vld [vmem:[#allocation2] sm:$0xf]
    %v22 = vlog2.pop %v21
    %v23 = vmul.f32 %v22, 0.6931472
    %vm24 = vcmp.ne.f32.partialorder %v23, %v23
    %vm25 = vcmp.eq.f32.partialorder %v23, inf
    %vm26 = vmor %vm24, %vm25
    %v27 = vsel %vm26, 3.4028235e+38, %v23
    %vm28 = vcmp.eq.f32.partialorder %v27, -inf
    %v29 = vsel %vm28, -3.4028235e+38, %v27
    %v30 = vsub.f32 0.0, %v29
    %v31 = vlaneseq
    %vm32 = vcmp.ge.s32.totalorder %v31, 0
    %vm33 = vcmp.lt.s32.totalorder %v31, 512
    %vm34 = vmand %vm32, %vm33
    %35 = vst.msk [vmem:[#allocation5] sm:$0xf] %vm34, %v30
    // Predicated region
    $region10: #{tpu_custom_call.1} parent=1 // pred_check
      _
    $region11: #{tpu_custom_call.1} parent=1 // pred_check_branch
      %37 = sbr.rel (0) target = $region13
    $region12: #{tpu_custom_call.1} parent=1 // pred_region
      %s39 = ssub.s32 64, 64
      %40 = vsyncadd [#allocation4], %s39
      %s42 = sshll.u32 [#allocation5], 4
      %s43 = int_to_ptr.vmem [resolvable:$true] %s42
      %45 = dma.vmem_to_hbm [thread:$0]  %s43, 64, %s1, [#allocation4]
    $region13: #{tpu_custom_call.1} parent=1 // pred_fallthru
      _
    // Predicated region
    $region14: #{tpu_custom_call.1} parent=1 // pred_check
      _
    $region15: #{tpu_custom_call.1} parent=1 // pred_check_branch
      %47 = sbr.rel (0) target = $region17
    $region16: #{tpu_custom_call.1} parent=1 // pred_region
      %48 = dma.done [#allocation4], 64
    $region17: #{tpu_custom_call.1} parent=1 // pred_fallthru
      _
    %49 = vsyncpa [#allocation3], 1
    %50 = vsyncpa [#allocation4], 1

</llo_original>
